<compile_context>
chip_gen: v5e
topology: v5e:2x2
jax: 0.10.0
libtpu: 0.0.40
codegen_flags: <defaults>
</compile_context>

<pallas_src>
import jax
import jax.numpy as jnp
from jax import lax
from jax.experimental import pallas as pl
from jax.experimental.pallas import tpu as pltpu


# --------------------------------------------------------------------------- #
# Kernels
# --------------------------------------------------------------------------- #
def _linear_kernel(x_ref, wt_ref, b_ref, q_ref):
    # Cast happens on the already-DMA'd native-dtype tile (VPU, in vregs);
    # the wrapper never materializes an f32 copy of `state` in HBM.
    x = x_ref[...].astype(jnp.float32)                       # (tb, n_in)
    q = jnp.dot(x, wt_ref[...], preferred_element_type=jnp.float32)
    q_ref[...] = q + b_ref[...]                              # (1, n_out) bcast


def _linear_gather_kernel(x_ref, w_ref, bcol_ref, a_ref, qa_ref):
    # Fused: q = x @ W^T + b, then q_acted[b] = q[b, action[b]].
    x = x_ref[...].astype(jnp.float32)                       # (tb, n_in)
    # qT = W @ x^T: contract n_in (the minor/lane dim of BOTH operands) so the
    # batch lands on lanes; no sublane->lane relayout needed afterwards.
    qT = lax.dot_general(
        w_ref[...], x,
        dimension_numbers=(((1,), (1,)), ((), ())),
        preferred_element_type=jnp.float32)                  # (n_out, tb)
    qT = qT + bcol_ref[...]                                  # (n_out, 1) bcast
    a = a_ref[...]                                           # (1, tb) int32
    row = lax.broadcasted_iota(jnp.int32, qT.shape, 0)       # action id / sublane
    # NOTE: out-of-range actions silently select 0.0 (torch.gather would raise);
    # clamp/validate upstream if actions can be malformed.
    picked = jnp.where(row == a, qT, 0.0)
    qa_ref[...] = jnp.sum(picked, axis=0, keepdims=True)     # (1, tb) lane-dense


# --------------------------------------------------------------------------- #
# Wrappers
# --------------------------------------------------------------------------- #
def prepare_params(weight, bias):
    """One-time parameter setup, hoisted out of the forward hot path."""
    w = jnp.asarray(weight, jnp.float32)          # (n_out, n_in) for gather path
    w_t = w.T                                     # (n_in, n_out): MXU (K,N) form
    b = jnp.asarray(bias, jnp.float32)
    return w, w_t, b.reshape(1, -1), b.reshape(-1, 1)


def _pick_tb(batch):
    """Batch tile.  Small batches -> one full block (block == array, always
    BlockSpec-legal).  Larger batches -> a multiple-of-128 tile big enough to
    amortize ~0.35us/grid-step, small enough to double-buffer on every
    generation (<=1 MiB/buffer f32 at n_in=64), and chosen so the grid has
    >=2 steps for DMA/compute overlap.  Non-divisible batches are handled by
    the pl.cdiv grid with a masked partial tail block — no giant-single-block
    fallback (would blow VMEM on v7x and have zero pipelining)."""
    if batch <= 512:
        return batch
    for tb in (4096, 2048, 1024):
        if batch >= 2 * tb:
            return tb
    return 512


@jax.jit
def linear_q(state, w_t, b_row):
    """q = state.float() @ W^T + b   (action is None path)."""
    B, n_in = state.shape
    n_out = w_t.shape[1]
    tb = _pick_tb(B)
    grid = (pl.cdiv(B, tb),)
    cost = pl.CostEstimate(
        flops=2 * B * n_in * n_out,
        transcendentals=0,
        bytes_accessed=B * n_in * state.dtype.itemsize
        + n_in * n_out * 4 + n_out * 4 + B * n_out * 4)
    return pl.pallas_call(
        _linear_kernel,
        out_shape=jax.ShapeDtypeStruct((B, n_out), jnp.float32),
        grid=grid,
        in_specs=[
            pl.BlockSpec((tb, n_in), lambda i: (i, 0)),
            pl.BlockSpec((n_in, n_out), lambda i: (0, 0)),
            pl.BlockSpec((1, n_out), lambda i: (0, 0)),
        ],
        out_specs=pl.BlockSpec((tb, n_out), lambda i: (i, 0)),
        compiler_params=pltpu.CompilerParams(
            dimension_semantics=("parallel",)),
        cost_estimate=cost,
    )(state, w_t, b_row)


@jax.jit
def linear_q_acted(state, w, b_col, action):
    """q_acted = squeeze(gather(state.float() @ W^T + b, action)) — fused."""
    B, n_in = state.shape
    n_out = w.shape[0]
    a_lane = action.astype(jnp.int32).reshape(1, B)      # lane-dense actions
    tb = _pick_tb(B)
    grid = (pl.cdiv(B, tb),)
    cost = pl.CostEstimate(
        flops=2 * B * n_in * n_out,
        transcendentals=0,
        bytes_accessed=B * n_in * state.dtype.itemsize
        + n_in * n_out * 4 + n_out * 4 + B * 4 + B * 4)
    qa = pl.pallas_call(
        _linear_gather_kernel,
        out_shape=jax.ShapeDtypeStruct((1, B), jnp.float32),  # lane-dense slab
        grid=grid,
        in_specs=[
            pl.BlockSpec((tb, n_in), lambda i: (i, 0)),
            pl.BlockSpec((n_out, n_in), lambda i: (0, 0)),
            pl.BlockSpec((n_out, 1), lambda i: (0, 0)),
            pl.BlockSpec((1, tb), lambda i: (0, i)),
        ],
        out_specs=pl.BlockSpec((1, tb), lambda i: (0, i)),
        compiler_params=pltpu.CompilerParams(
            dimension_semantics=("parallel",)),
        cost_estimate=cost,
    )(state, w, b_col, a_lane)
    return jnp.squeeze(qa.reshape(B))                     # mirrors torch.squeeze


def linear_classifier_forward(state, weight, bias, action=None):
    """Drop-in equivalent of LinearClassifier.forward.  For repeated calls,
    run prepare_params() once and call linear_q / linear_q_acted directly."""
    w, w_t, b_row, b_col = prepare_params(weight, bias)
    if action is None:
        return linear_q(state, w_t, b_row)
    return linear_q_acted(state, w, b_col, action)


# --------------------------------------------------------------------------- #
# Self-test
# --------------------------------------------------------------------------- #
if __name__ == "__main__":
    key = jax.random.PRNGKey(0)
    k_x, k_w, k_b, k_a, k_x2, k_a2 = jax.random.split(key, 6)

    # input_shape = (history_length * max_obj * 2,) -> history=4, max_obj=8
    n_in = 4 * 8 * 2   # 64
    n_out = 6          # number of actions (output_shape[0])
    bound = 1.0 / float(jnp.sqrt(n_in))
    weight = jax.random.uniform(k_w, (n_out, n_in), minval=-bound, maxval=bound,
                                dtype=jnp.float32)
    bias = jax.random.uniform(k_b, (n_out,), minval=-bound, maxval=bound,
                              dtype=jnp.float32)

    # One-time parameter prep (hoisted out of the forward hot path).
    w, w_t, b_row, b_col = prepare_params(weight, bias)

    # --- small batch, f32 state, single-block grid ---------------------------
    B = 8
    state = jax.random.normal(k_x, (B, n_in), dtype=jnp.float32)
    action = jax.random.randint(k_a, (B, 1), 0, n_out)

    q = jax.block_until_ready(linear_q(state, w_t, b_row))
    qa = jax.block_until_ready(linear_q_acted(state, w, b_col, action))
    q_wrap = jax.block_until_ready(linear_classifier_forward(state, weight, bias))

    q_ref = state @ weight.T + bias
    qa_ref = jnp.squeeze(jnp.take_along_axis(q_ref, action, axis=1))
    assert q.shape == (B, n_out) and qa.shape == (B,)
    assert jnp.allclose(q, q_ref, atol=1e-5)
    assert jnp.allclose(q_wrap, q_ref, atol=1e-5)
    assert jnp.allclose(qa, qa_ref, atol=1e-5)

    # --- larger batch, bf16 state (native-dtype DMA + in-kernel cast),
    #     tiled grid with a masked partial tail block (640 = 512 + 128) ------
    B2 = 640
    state2 = jax.random.normal(k_x2, (B2, n_in), dtype=jnp.bfloat16)
    action2 = jax.random.randint(k_a2, (B2, 1), 0, n_out)

    q2 = jax.block_until_ready(linear_q(state2, w_t, b_row))
    qa2 = jax.block_until_ready(linear_q_acted(state2, w, b_col, action2))

    q2_ref = state2.astype(jnp.float32) @ weight.T + bias
    qa2_ref = jnp.squeeze(jnp.take_along_axis(q2_ref, action2, axis=1))
    assert q2.shape == (B2, n_out) and qa2.shape == (B2,)
    assert jnp.allclose(q2, q2_ref, atol=1e-4)
    assert jnp.allclose(qa2, qa2_ref, atol=1e-4)

    print("KERNEL_OK")
</pallas_src>

<mosaic_0001>
module attributes {stable_mosaic.version = 11 : i64} {
  func.func @_linear_kernel(%arg0: i32, %arg1: memref<8x64xf32, #tpu.memory_space<vmem>>, %arg2: memref<64x6xf32, #tpu.memory_space<vmem>>, %arg3: memref<1x6xf32, #tpu.memory_space<vmem>>, %arg4: memref<8x6xf32, #tpu.memory_space<vmem>>) attributes {dimension_semantics = [#tpu.dimension_semantics<parallel>], iteration_bounds = array<i64: 1>, scalar_prefetch = 0 : i64, scratch_operands = 0 : i64, tpu.core_type = #tpu.core_type<tc>, window_params = [{transform_indices = @transform_0, window_bounds = array<i64: 8, 64>}, {pipeline_mode = #tpu.pipeline_mode<synchronous>, transform_indices = @transform_1, window_bounds = array<i64: 64, 6>}, {pipeline_mode = #tpu.pipeline_mode<synchronous>, transform_indices = @transform_2, window_bounds = array<i64: 1, 6>}, {transform_indices = @transform_3, window_bounds = array<i64: 8, 6>}]} {
    %c0 = arith.constant 0 : index
    %c0_0 = arith.constant 0 : index
    %0 = vector.load %arg1[%c0, %c0_0] : memref<8x64xf32, #tpu.memory_space<vmem>>, vector<8x64xf32>
    %c0_1 = arith.constant 0 : index
    %c0_2 = arith.constant 0 : index
    %1 = vector.load %arg2[%c0_1, %c0_2] : memref<64x6xf32, #tpu.memory_space<vmem>>, vector<64x6xf32>
    %cst = arith.constant dense<0.000000e+00> : vector<8x6xf32>
    %2 = tpu.matmul %0, %1, %cst {dimension_numbers = #tpu.dot_dimension_numbers<[1], [0], [0], [1], [0, 0, 1, 1], [], []>} : vector<8x64xf32>, vector<64x6xf32>, vector<8x6xf32> -> vector<8x6xf32>
    %c0_3 = arith.constant 0 : index
    %c0_4 = arith.constant 0 : index
    %3 = vector.load %arg3[%c0_3, %c0_4] : memref<1x6xf32, #tpu.memory_space<vmem>>, vector<1x6xf32>
    %4 = vector.broadcast %3 : vector<1x6xf32> to vector<8x6xf32>
    %5 = arith.addf %2, %4 : vector<8x6xf32>
    %c0_5 = arith.constant 0 : index
    %c0_6 = arith.constant 0 : index
    %6 = vector.load %arg4[%c0_5, %c0_6] : memref<8x6xf32, #tpu.memory_space<vmem>>, vector<8x6xf32>
    tpu.vector_store %arg4[%c0_5, %c0_6], %5 {strides = array<i32>} : memref<8x6xf32, #tpu.memory_space<vmem>>, vector<8x6xf32>,
    return
  }
  func.func @transform_0(%arg0: i32) -> (i32, i32) {
    %c0_i32 = arith.constant 0 : i32
    %c0_i32_0 = arith.constant 0 : i32
    return %arg0, %c0_i32 : i32, i32
  }
  func.func @transform_1(%arg0: i32) -> (i32, i32) {
    %c0_i32 = arith.constant 0 : i32
    %c0_i32_0 = arith.constant 0 : i32
    %c0_i32_1 = arith.constant 0 : i32
    return %c0_i32, %c0_i32_0 : i32, i32
  }
  func.func @transform_2(%arg0: i32) -> (i32, i32) {
    %c0_i32 = arith.constant 0 : i32
    %c0_i32_0 = arith.constant 0 : i32
    %c0_i32_1 = arith.constant 0 : i32
    return %c0_i32, %c0_i32_0 : i32, i32
  }
  func.func @transform_3(%arg0: i32) -> (i32, i32) {
    %c0_i32 = arith.constant 0 : i32
    %c0_i32_0 = arith.constant 0 : i32
    return %arg0, %c0_i32 : i32, i32
  }
}

</mosaic_0001>

<llo_original>
// kernel: linear_q.1
$region0: #{linear_q.1}
  #allocation0 [shape = 'u32[]', space=smem, size = 0x4, offset = 0x4, fixed_abs, tag = 'smem constant byte address 0x4 - core index']
  #allocation1 [shape = 'u32[72,128]{1,0:T(1,128)}', space=vmem, size = 0x9000, scoped, tag = 'internal scratch']
  %s0 = inlined_call_operand.vmem [shape: f32[8,64], index: 0, kind: input, shape index: {}]
  %s1 = inlined_call_operand.vmem [shape: f32[64,6], index: 1, kind: input, shape index: {}]
  %s2 = inlined_call_operand.vmem [shape: f32[1,6], index: 2, kind: input, shape index: {}]
  %s3 = inlined_call_operand.hbm [shape: f32[8,6], index: 3, kind: output, shape index: {}]
  %s4 = sld [smem:[#allocation0]]
  $region22: #{linear_q.1} parent=0
    _
  %s6 = ssub.s32 1, %s4
  %s7 = scalar_select 0, %s6, %s4
  $region1: #{linear_q.1} parent=0
    #allocation2 [shape = 'u8[4096]{0}', space=vmem, size = 0x1000, scoped, tag = 'output window, operand 0, single buffered']
    #allocation3 [shape = 's32[1]{0}', space=sflag, size = 0x4, scoped, tag = 'scoped memory for linear_q.1']
    %8 = vsyncpa [#allocation3], 0
    // Predicated region
    $region2: #{linear_q.1} parent=1 // pred_check
      _
    $region3: #{linear_q.1} parent=1 // pred_check_branch
      %10 = sbr.rel (0) target = $region5
    $region4: #{linear_q.1} parent=1 // pred_region
      _
    $region5: #{linear_q.1} parent=1 // pred_fallthru
      _
    // Predicated region
    $region6: #{linear_q.1} parent=1 // pred_check
      _
    $region7: #{linear_q.1} parent=1 // pred_check_branch
      %12 = sbr.rel (0) target = $region9
    $region8: #{linear_q.1} parent=1 // pred_region
      _
    $region9: #{linear_q.1} parent=1 // pred_fallthru
      _
    // Predicated region
    $region10: #{linear_q.1} parent=1 // pred_check
      _
    $region11: #{linear_q.1} parent=1 // pred_check_branch
      %14 = sbr.rel (0) target = $region13
    $region12: #{linear_q.1} parent=1 // pred_region
      _
    $region13: #{linear_q.1} parent=1 // pred_fallthru
      _
    %v15 = vld [vmem:[%s0] sm:$0xff]
    %v16 = vld [vmem:[%s1] sm:$0xff]
    %v17 = vld [vmem:[%s1 + $0x8] sm:$0xff]
    %v18 = vld [vmem:[%s1 + $0x10] sm:$0xff]
    %v19 = vld [vmem:[%s1 + $0x18] sm:$0xff]
    %v20 = vld [vmem:[%s1 + $0x20] sm:$0xff]
    %v21 = vld [vmem:[%s1 + $0x28] sm:$0xff]
    %v22 = vld [vmem:[%s1 + $0x30] sm:$0xff]
    %v23 = vld [vmem:[%s1 + $0x38] sm:$0xff]
    %v24 = vld [vmem:[%s2] sm:$0x1]
    %v26 = vperm.slane %v24, 0
    %vm28 = vcmask 523264
    %v30 = vsel %vm28, %v15, 0
    %32 = vmatpush.msra.mxu0 0.0
    %33 = vmatpush.msra.mxu0 0.0
    %34 = vmatpush.msra.mxu0 0.0
    %35 = vmatpush.msra.mxu0 0.0
    %36 = vmatpush.msra.mxu0 0.0
    %37 = vmatpush.msra.mxu0 0.0
    %38 = vmatpush.msra.mxu0 0.0
    %39 = vmatpush.msra.mxu0 0.0
    %40 = vmatpush.msra.mxu0 %v23
    %41 = vmatpush.msra.mxu0 %v22
    %42 = vmatpush.msra.mxu0 %v21
    %43 = vmatpush.msra.mxu0 %v20
    %44 = vmatpush.msra.mxu0 %v19
    %45 = vmatpush.msra.mxu0 %v18
    %46 = vmatpush.msra.mxu0 %v17
    %47 = vmatpush.msra.mxu0 %v16
    %48 = vmatmul.f32.gmra.mxu0 %v30
    %v49 = vpop.f32.mrf.mxu0
    %v50 = vadd.f32 %v26, %v49
    %51 = vdwg.mxu0
    %vm52 = vcmask 48128
    %53 = vst.msk [vmem:[#allocation2] sm:$0xff] %vm52, %v50
    // Predicated region
    $region14: #{linear_q.1} parent=1 // pred_check
      _
    $region15: #{linear_q.1} parent=1 // pred_check_branch
      %55 = sbr.rel (0) target = $region17
    $region16: #{linear_q.1} parent=1 // pred_region
      %57 = vsyncadd [#allocation3], 0
      %s59 = sshll.u32 [#allocation2], 4
      %s60 = int_to_ptr.vmem [resolvable:$true] %s59
      %s61 = sshll.u32 %s3, 4
      %s62 = int_to_ptr.hbm [resolvable:$true] %s61
      %64 = dma.vmem_to_hbm [thread:$0]  %s60, 128, %s62, [#allocation3]
    $region17: #{linear_q.1} parent=1 // pred_fallthru
      _
    // Predicated region
    $region18: #{linear_q.1} parent=1 // pred_check
      _
    $region19: #{linear_q.1} parent=1 // pred_check_branch
      %66 = sbr.rel (0) target = $region21
    $region20: #{linear_q.1} parent=1 // pred_region
      %68 = dma.done [#allocation3], 128
    $region21: #{linear_q.1} parent=1 // pred_fallthru
      _
    %69 = vsyncpa [#allocation3], 1

</llo_original>
